<compile_context>
chip_gen: v7x
topology: tpu7x:2x2x1
jax: 0.10.0
libtpu: 0.0.40
codegen_flags: <defaults>
</compile_context>

<pallas_src>
import functools

import jax
import jax.numpy as jnp
from jax.experimental import pallas as pl
from jax.experimental.pallas import tpu as pltpu

_LANE = 128
_SUBLANE_BF16 = 16
_MXU_ALIGN = 256


def _round_up(x, m):
    return (x + m - 1) // m * m


def _tpu_vmem_capacity_bytes():
    try:
        return int(pltpu.get_tpu_info().vmem_capacity_bytes)
    except Exception:
        return 64 * 2 ** 20          # conservative fallback: v7x per-TC VMEM


def _tensorcores_per_chip():
    try:
        return max(1, int(getattr(jax.devices()[0], "num_cores", 1)))
    except Exception:
        return 1


def _vmem_bytes_estimate(tr, tv, h_dim):
    """Rough VMEM working-set estimate for one grid step (double-buffered)."""
    h_bytes = 2 * tr * h_dim * 2          # bf16 h row tile (2 pipeline buffers)
    w_bytes = 2 * h_dim * tv * 2          # bf16 W vocab tile (2 pipeline buffers)
    small = 2 * tr * (4 + 4 + 4) + 3 * tr * 4   # tgt/mask/out tiles + f32 scratch
    temps = 6 * tr * tv * 4               # (tr, tv) f32 logits / exp / select temps
    return h_bytes + w_bytes + small + temps


def _select_tiles(rows, h_dim, v_pad, tr, tv, vmem_budget, num_tc):
    """Pick (tr, tv).  tv must divide the padded vocab width (no per-call W copy)."""
    tv_auto = tv is None
    if tv_auto:
        tv = next(c for c in (512, 256, 128) if v_pad % c == 0)
    assert v_pad % tv == 0, "vocab tile must divide the padded vocab width"

    if tr is None:
        if rows >= 512:
            # W is re-streamed once per row tile, so arithmetic intensity on the
            # streamed W bytes is exactly `tr` FLOPs/byte: go big (<=1024,
            # 256-aligned for the MXU), but keep >=2 row tiles on multi-TC chips
            # so the "parallel" row axis actually shards across TensorCores.
            n_tiles = max(1, -(-rows // 1024))
            if num_tc >= 2:
                n_tiles = max(n_tiles, 2)
            tr = min(1024, _round_up(-(-rows // n_tiles), _MXU_ALIGN))
        else:
            tr = min(256, _round_up(rows, _SUBLANE_BF16))
        while tr > _MXU_ALIGN and _vmem_bytes_estimate(tr, tv, h_dim) > vmem_budget:
            tr -= _MXU_ALIGN
    if tv_auto:
        while tv > 128 and _vmem_bytes_estimate(tr, tv, h_dim) > vmem_budget:
            tv //= 2
    return tr, tv


# ----------------------------------------------------------------------------
# Fused head + LanguageModelCriterion kernel.
# Per row r (r = flattened (b, t)):
#   logits[r, :] = h[r, :] @ W                      (bf16 in, f32 MXU accum)
#   lse[r]       = logsumexp_v logits[r, v]         (online over vocab tiles)
#   picked[r]    = logits[r, tgt[r]]
#   num[r]       = (lse[r] - picked[r]) * mask[r]   == -log_softmax[r, tgt[r]] * mask[r]
# Grid: (row tiles [parallel], vocab tiles [arbitrary reduction, innermost]).
# ----------------------------------------------------------------------------
def _fused_head_loss_kernel(h_ref, w_ref, tgt_ref, msk_ref, num_ref,
                            m_sc, l_sc, p_sc, *, v_actual, tv, needs_vpad_mask):
    j = pl.program_id(1)

    @pl.when(j == 0)
    def _():
        m_sc[...] = jnp.full_like(m_sc, -jnp.inf)
        l_sc[...] = jnp.zeros_like(l_sc)
        p_sc[...] = jnp.zeros_like(p_sc)

    # (tr, H) @ (H, tv) -> (tr, tv); bf16 operands, f32 accumulation on the MXU.
    logits = jnp.dot(h_ref[...], w_ref[...], preferred_element_type=jnp.float32)

    # Global vocab ids of this tile's columns.
    col = j * tv + jax.lax.broadcasted_iota(jnp.int32, logits.shape, 1)

    if needs_vpad_mask:
        # Compile-time path: only taken when the vocab is not tile-aligned.
        # The same masked operand is reused for the picked-logit select below,
        # so padded (possibly garbage) columns can never be selected either
        # (targets are always < v_actual anyway).
        logits_m = jnp.where(col < v_actual, logits, -jnp.inf)
    else:
        logits_m = logits

    # Online logsumexp over the vocab axis.
    m_new = jnp.maximum(m_sc[...], jnp.max(logits_m, axis=-1, keepdims=True))
    alpha = jnp.exp(m_sc[...] - m_new)
    l_sc[...] = alpha * l_sc[...] + jnp.sum(jnp.exp(logits_m - m_new),
                                            axis=-1, keepdims=True)
    m_sc[...] = m_new

    # Accumulate the target logit (each row's target falls in exactly one tile).
    p_sc[...] += jnp.sum(jnp.where(col == tgt_ref[...], logits_m, 0.0),
                         axis=-1, keepdims=True)

    @pl.when(j == pl.num_programs(1) - 1)
    def _():
        lse = m_sc[...] + jnp.log(l_sc[...])                 # (tr, 1)
        num_ref[...] = (lse - p_sc[...]) * msk_ref[...]      # -logp[tgt] * mask


def fused_head_and_loss_num(h, w_padded, targets, mask, *, v_actual,
                            tr=None, tv=None):
    """sum_r  -log_softmax(h @ W)[r, targets[r]] * mask[r]   (loss numerator).

    `w_padded` must be bf16 with its column count a multiple of 128 and padded
    columns zero-filled (done once at model init, never per call).
    """
    rows, h_dim = h.shape
    v_pad = w_padded.shape[1]
    assert v_pad % _LANE == 0 and v_pad >= v_actual

    vmem_cap = _tpu_vmem_capacity_bytes()
    num_tc = _tensorcores_per_chip()
    tr, tv = _select_tiles(rows, h_dim, v_pad, tr, tv,
                           vmem_budget=int(0.8 * vmem_cap), num_tc=num_tc)
    r_pad = _round_up(rows, tr)
    gr, gv = r_pad // tr, v_pad // tv

    # h already bf16; pad rows only when needed (statically skipped otherwise).
    # Padded rows must stay zero-filled: zero h keeps their lse finite so the
    # mask=0 rows contribute an exact 0 to the final sum (never NaN).
    hb = h.astype(jnp.bfloat16)
    tg = targets.astype(jnp.int32).reshape(rows, 1)
    mk = mask.astype(jnp.float32).reshape(rows, 1)
    if r_pad != rows:
        pad = ((0, r_pad - rows), (0, 0))
        hb = jnp.pad(hb, pad)
        tg = jnp.pad(tg, pad)
        mk = jnp.pad(mk, pad)

    est = _vmem_bytes_estimate(tr, tv, h_dim)
    vmem_limit = int(min(0.9 * vmem_cap, max(32 * 2 ** 20, int(1.5 * est))))

    kernel = functools.partial(_fused_head_loss_kernel,
                               v_actual=v_actual, tv=tv,
                               needs_vpad_mask=(v_pad > v_actual))

    num_rows = pl.pallas_call(
        kernel,
        out_shape=jax.ShapeDtypeStruct((r_pad, 1), jnp.float32),
        grid_spec=pltpu.PrefetchScalarGridSpec(
            num_scalar_prefetch=0,
            grid=(gr, gv),
            in_specs=[
                pl.BlockSpec((tr, h_dim), lambda i, j: (i, 0)),  # h row tile (resident over j)
                pl.BlockSpec((h_dim, tv), lambda i, j: (0, j)),  # streamed W vocab tile
                pl.BlockSpec((tr, 1), lambda i, j: (i, 0)),      # targets
                pl.BlockSpec((tr, 1), lambda i, j: (i, 0)),      # mask
            ],
            out_specs=pl.BlockSpec((tr, 1), lambda i, j: (i, 0)),
            scratch_shapes=[pltpu.VMEM((tr, 1), jnp.float32),    # running max
                            pltpu.VMEM((tr, 1), jnp.float32),    # running sum-exp
                            pltpu.VMEM((tr, 1), jnp.float32)],   # picked target logit
        ),
        compiler_params=pltpu.CompilerParams(
            dimension_semantics=("parallel", "arbitrary"),
            vmem_limit_bytes=vmem_limit),
    )(hb, w_padded, tg, mk)

    return jnp.sum(num_rows)


# ----------------------------------------------------------------------------
# LossWrapper equivalent
# ----------------------------------------------------------------------------
class LossWrapperPallas:
    """JAX/Pallas equivalent of misc.denseloss_wrapper.LossWrapper (label_smoothing=0)."""

    def __init__(self, emb_table, w_out):
        h_dim, v = w_out.shape
        self.vocab = int(v)
        # bf16 parameters, prepared ONCE at init:
        #  - embedding table in bf16 so h is produced in bf16 directly
        #  - vocab head in bf16, zero-padded to a multiple of 128 lanes, so the
        #    kernel streams it directly with no per-call pad/cast HBM copy.
        self.emb_bf16 = jnp.asarray(emb_table, jnp.bfloat16)      # (V, H)
        v128 = _round_up(v, _LANE)
        w_b = jnp.asarray(w_out, jnp.bfloat16)                    # (H, V)
        if v128 != v:
            w_b = jnp.pad(w_b, ((0, 0), (0, v128 - v)))
        self.w_out_bf16 = w_b                                     # (H, v128)

    def _hidden(self, fc_feats, att_feats, densecap, labels, att_masks, personality):
        # Deterministic stand-in captioning decoder trunk (teacher forcing on
        # labels[:, :-1]).  att_feats / densecap / att_masks / personality are
        # accepted but unused.  Produces h directly in bf16 (the kernel's MXU
        # operand dtype) to avoid an extra f32 HBM round trip.
        # TODO(synk): optionally fuse this gather via PrefetchScalarGridSpec +
        # pl.Element row-gather on emb_table for very large H.
        B, Lp1 = labels.shape
        L = Lp1 - 1
        h = fc_feats.astype(jnp.bfloat16)[:, None, :] + self.emb_bf16[labels[:, :L]]
        return h.reshape(B * L, -1)                               # (B*L, H) bf16

    def __call__(self, fc_feats, att_feats, densecap, labels, masks, att_masks,
                 personality, gts, gt_indices, sc_flag, tr=None, tv=None):
        out = {}
        if not sc_flag:
            B, Lp1 = labels.shape
            L = Lp1 - 1
            h = self._hidden(fc_feats, att_feats, densecap, labels, att_masks,
                             personality)
            tgt = labels[:, 1:].reshape(B * L)                       # (B*L,)
            msk = masks[:, 1:].astype(jnp.float32).reshape(B * L)    # (B*L,)
            num = fused_head_and_loss_num(h, self.w_out_bf16, tgt, msk,
                                          v_actual=self.vocab, tr=tr, tv=tv)
            den = jnp.sum(msk)
            loss = num / den   # NaN when sum(masks[:,1:]) == 0, same as the reference
        else:
            # TODO(synk): sc_flag=True path needs RewardCriterion + sampling (not in this module).
            raise NotImplementedError("sc_flag=True path not implemented")
        out['loss'] = loss
        return out


# ----------------------------------------------------------------------------
# Pure-JAX reference (same bf16-operand / f32-accumulation head) for checking
# ----------------------------------------------------------------------------
def _reference_loss(emb, w_out, fc_feats, labels, masks):
    B, Lp1 = labels.shape
    L = Lp1 - 1
    h = (fc_feats.astype(jnp.bfloat16)[:, None, :]
         + emb.astype(jnp.bfloat16)[labels[:, :L]]).reshape(B * L, -1)
    logits = jnp.dot(h, w_out.astype(jnp.bfloat16),
                     preferred_element_type=jnp.float32)
    logp = jax.nn.log_softmax(logits, axis=-1).reshape(B, L, -1)
    tgt = labels[:, 1:]
    msk = masks[:, 1:].astype(jnp.float32)
    picked = jnp.take_along_axis(logp, tgt[:, :, None], axis=2)[:, :, 0]
    return jnp.sum(-picked * msk) / jnp.sum(msk)


def _run_case(key, B, L, H, V, N_ATT, lengths, tr=None, tv=None):
    k_fc, k_att, k_dc, k_lab, k_emb, k_w, k_pers = jax.random.split(key, 7)

    fc_feats = jax.random.normal(k_fc, (B, H), dtype=jnp.float32)
    att_feats = jax.random.normal(k_att, (B, N_ATT, H), dtype=jnp.float32)
    densecap = jax.random.normal(k_dc, (B, N_ATT, H), dtype=jnp.float32)
    labels = jax.random.randint(k_lab, (B, L + 1), 1, V, dtype=jnp.int32)
    masks = (jnp.arange(L + 1)[None, :] < lengths[:, None]).astype(jnp.float32)
    att_masks = jnp.ones((B, N_ATT), dtype=jnp.float32)
    personality = jax.random.randint(k_pers, (B,), 0, 10, dtype=jnp.int32)
    gts, gt_indices = None, None     # only used in the sc_flag=True path

    emb_table = 0.1 * jax.random.normal(k_emb, (V, H), dtype=jnp.float32)
    w_out = 0.1 * jax.random.normal(k_w, (H, V), dtype=jnp.float32)

    wrapper = LossWrapperPallas(emb_table, w_out)
    out = wrapper(fc_feats, att_feats, densecap, labels, masks, att_masks,
                  personality, gts, gt_indices, sc_flag=False, tr=tr, tv=tv)
    loss = jax.block_until_ready(out['loss'])

    ref = _reference_loss(emb_table, w_out, fc_feats, labels, masks)
    assert jnp.allclose(loss, ref, rtol=2e-4, atol=2e-4), (loss, ref)


if __name__ == "__main__":
    key = jax.random.PRNGKey(0)
    k1, k2 = jax.random.split(key)

    # Case 1: tiny shapes matching the original spec; vocab (32) is not
    # 128-aligned, so the padded-vocab mask path is exercised (gv=1).
    _run_case(k1, B=2, L=8, H=32, V=32, N_ATT=4,
              lengths=jnp.array([9, 6], dtype=jnp.int32))

    # Case 2: multiple row tiles (parallel axis), multiple vocab tiles (online
    # logsumexp reduction), tile-aligned vocab (mask statically skipped), and
    # ragged row padding (rows=24, tr=16 -> r_pad=32).
    _run_case(k2, B=3, L=8, H=64, V=256, N_ATT=4,
              lengths=jnp.array([9, 6, 4], dtype=jnp.int32), tr=16, tv=128)

    print("KERNEL_OK")
</pallas_src>

<mosaic_0001>
module attributes {stable_mosaic.version = 11 : i64} {
  func.func @_fused_head_loss_kernel(%arg0: i32, %arg1: i32, %arg2: memref<16x32xbf16, #tpu.memory_space<vmem>>, %arg3: memref<32x128xbf16, #tpu.memory_space<vmem>>, %arg4: memref<16x1xi32, #tpu.memory_space<vmem>>, %arg5: memref<16x1xf32, #tpu.memory_space<vmem>>, %arg6: memref<16x1xf32, #tpu.memory_space<vmem>>, %arg7: memref<16x1xf32, #tpu.memory_space<vmem>>, %arg8: memref<16x1xf32, #tpu.memory_space<vmem>>, %arg9: memref<16x1xf32, #tpu.memory_space<vmem>>) attributes {dimension_semantics = [#tpu.dimension_semantics<parallel>, #tpu.dimension_semantics<arbitrary>], iteration_bounds = array<i64: 1, 1>, scalar_prefetch = 0 : i64, scratch_operands = 3 : i64, tpu.core_type = #tpu.core_type<tc>, window_params = [{transform_indices = @transform_0, window_bounds = array<i64: 16, 32>}, {transform_indices = @transform_1, window_bounds = array<i64: 32, 128>}, {transform_indices = @transform_2, window_bounds = array<i64: 16, 1>}, {transform_indices = @transform_3, window_bounds = array<i64: 16, 1>}, {transform_indices = @transform_4, window_bounds = array<i64: 16, 1>}]} {
    %c0_i32 = arith.constant 0 : i32
    %0 = arith.cmpi eq, %arg1, %c0_i32 : i32
    %1 = arith.extui %0 : i1 to i32
    %c0_i32_0 = arith.constant 0 : i32
    %2 = arith.cmpi ne, %1, %c0_i32_0 : i32
    scf.if %2 {
      %cst_27 = arith.constant 0xFF800000 : f32
      %44 = vector.broadcast %cst_27 : f32 to vector<16x1xf32>
      %c0_28 = arith.constant 0 : index
      %c0_29 = arith.constant 0 : index
      %45 = vector.load %arg7[%c0_28, %c0_29] : memref<16x1xf32, #tpu.memory_space<vmem>>, vector<16x1xf32>
      tpu.vector_store %arg7[%c0_28, %c0_29], %44 {strides = array<i32>} : memref<16x1xf32, #tpu.memory_space<vmem>>, vector<16x1xf32>,
      %cst_30 = arith.constant 0.000000e+00 : f32
      %46 = vector.broadcast %cst_30 : f32 to vector<16x1xf32>
      %c0_31 = arith.constant 0 : index
      %c0_32 = arith.constant 0 : index
      %47 = vector.load %arg8[%c0_31, %c0_32] : memref<16x1xf32, #tpu.memory_space<vmem>>, vector<16x1xf32>
      tpu.vector_store %arg8[%c0_31, %c0_32], %46 {strides = array<i32>} : memref<16x1xf32, #tpu.memory_space<vmem>>, vector<16x1xf32>,
      %cst_33 = arith.constant 0.000000e+00 : f32
      %48 = vector.broadcast %cst_33 : f32 to vector<16x1xf32>
      %c0_34 = arith.constant 0 : index
      %c0_35 = arith.constant 0 : index
      %49 = vector.load %arg9[%c0_34, %c0_35] : memref<16x1xf32, #tpu.memory_space<vmem>>, vector<16x1xf32>
      tpu.vector_store %arg9[%c0_34, %c0_35], %48 {strides = array<i32>} : memref<16x1xf32, #tpu.memory_space<vmem>>, vector<16x1xf32>,
    } else {
    }
    %c0 = arith.constant 0 : index
    %c0_1 = arith.constant 0 : index
    %3 = vector.load %arg2[%c0, %c0_1] : memref<16x32xbf16, #tpu.memory_space<vmem>>, vector<16x32xbf16>
    %c0_2 = arith.constant 0 : index
    %c0_3 = arith.constant 0 : index
    %4 = vector.load %arg3[%c0_2, %c0_3] : memref<32x128xbf16, #tpu.memory_space<vmem>>, vector<32x128xbf16>
    %cst = arith.constant dense<0.000000e+00> : vector<16x128xf32>
    %5 = tpu.matmul %3, %4, %cst {dimension_numbers = #tpu.dot_dimension_numbers<[1], [0], [0], [1], [0, 0, 1, 1], [], []>} : vector<16x32xbf16>, vector<32x128xbf16>, vector<16x128xf32> -> vector<16x128xf32>
    %c128_i32 = arith.constant 128 : i32
    %6 = arith.muli %arg1, %c128_i32 : i32
    %7 = tpu.iota {dimensions = array<i32: 1>} : vector<16x128xi32>
    %8 = vector.broadcast %6 : i32 to vector<16x128xi32>
    %9 = arith.addi %8, %7 : vector<16x128xi32>
    %c32_i32 = arith.constant 32 : i32
    %10 = vector.broadcast %c32_i32 : i32 to vector<16x128xi32>
    %11 = arith.cmpi slt, %9, %10 : vector<16x128xi32>
    %cst_4 = arith.constant 0xFF800000 : f32
    %12 = vector.broadcast %cst_4 : f32 to vector<16x128xf32>
    %13 = arith.select %11, %5, %12 : vector<16x128xi1>, vector<16x128xf32>
    %c0_5 = arith.constant 0 : index
    %c0_6 = arith.constant 0 : index
    %14 = vector.load %arg7[%c0_5, %c0_6] : memref<16x1xf32, #tpu.memory_space<vmem>>, vector<16x1xf32>
    %cst_7 = arith.constant dense<0xFF800000> : vector<16xf32>
    %15 = vector.multi_reduction <maximumf>, %13, %cst_7 [1] : vector<16x128xf32> to vector<16xf32>
    %16 = vector.shape_cast %15 : vector<16xf32> to vector<16x1xf32>
    %17 = arith.maximumf %14, %16 : vector<16x1xf32>
    %c0_8 = arith.constant 0 : index
    %c0_9 = arith.constant 0 : index
    %18 = vector.load %arg7[%c0_8, %c0_9] : memref<16x1xf32, #tpu.memory_space<vmem>>, vector<16x1xf32>
    %19 = arith.subf %18, %17 : vector<16x1xf32>
    %20 = math.exp %19 : vector<16x1xf32>
    %c0_10 = arith.constant 0 : index
    %c0_11 = arith.constant 0 : index
    %21 = vector.load %arg8[%c0_10, %c0_11] : memref<16x1xf32, #tpu.memory_space<vmem>>, vector<16x1xf32>
    %22 = arith.mulf %20, %21 : vector<16x1xf32>
    %23 = vector.broadcast %17 : vector<16x1xf32> to vector<16x128xf32>
    %24 = arith.subf %13, %23 : vector<16x128xf32>
    %25 = math.exp %24 : vector<16x128xf32>
    %cst_12 = arith.constant dense<0.000000e+00> : vector<16xf32>
    %26 = vector.multi_reduction <add>, %25, %cst_12 [1] : vector<16x128xf32> to vector<16xf32>
    %27 = vector.shape_cast %26 : vector<16xf32> to vector<16x1xf32>
    %28 = arith.addf %22, %27 : vector<16x1xf32>
    %c0_13 = arith.constant 0 : index
    %c0_14 = arith.constant 0 : index
    %29 = vector.load %arg8[%c0_13, %c0_14] : memref<16x1xf32, #tpu.memory_space<vmem>>, vector<16x1xf32>
    tpu.vector_store %arg8[%c0_13, %c0_14], %28 {strides = array<i32>} : memref<16x1xf32, #tpu.memory_space<vmem>>, vector<16x1xf32>,
    %c0_15 = arith.constant 0 : index
    %c0_16 = arith.constant 0 : index
    %30 = vector.load %arg7[%c0_15, %c0_16] : memref<16x1xf32, #tpu.memory_space<vmem>>, vector<16x1xf32>
    tpu.vector_store %arg7[%c0_15, %c0_16], %17 {strides = array<i32>} : memref<16x1xf32, #tpu.memory_space<vmem>>, vector<16x1xf32>,
    %c0_17 = arith.constant 0 : index
    %c0_18 = arith.constant 0 : index
    %31 = vector.load %arg9[%c0_17, %c0_18] : memref<16x1xf32, #tpu.memory_space<vmem>>, vector<16x1xf32>
    %c0_19 = arith.constant 0 : index
    %c0_20 = arith.constant 0 : index
    %32 = vector.load %arg4[%c0_19, %c0_20] : memref<16x1xi32, #tpu.memory_space<vmem>>, vector<16x1xi32>
    %33 = vector.broadcast %32 : vector<16x1xi32> to vector<16x128xi32>
    %34 = arith.cmpi eq, %9, %33 : vector<16x128xi32>
    %cst_21 = arith.constant 0.000000e+00 : f32
    %35 = vector.broadcast %cst_21 : f32 to vector<16x128xf32>
    %36 = arith.select %34, %13, %35 : vector<16x128xi1>, vector<16x128xf32>
    %cst_22 = arith.constant dense<0.000000e+00> : vector<16xf32>
    %37 = vector.multi_reduction <add>, %36, %cst_22 [1] : vector<16x128xf32> to vector<16xf32>
    %38 = vector.shape_cast %37 : vector<16xf32> to vector<16x1xf32>
    %39 = arith.addf %31, %38 : vector<16x1xf32>
    %c0_23 = arith.constant 0 : index
    %c0_24 = arith.constant 0 : index
    %40 = vector.load %arg9[%c0_23, %c0_24] : memref<16x1xf32, #tpu.memory_space<vmem>>, vector<16x1xf32>
    tpu.vector_store %arg9[%c0_23, %c0_24], %39 {strides = array<i32>} : memref<16x1xf32, #tpu.memory_space<vmem>>, vector<16x1xf32>,
    %c0_i32_25 = arith.constant 0 : i32
    %41 = arith.cmpi eq, %arg1, %c0_i32_25 : i32
    %42 = arith.extui %41 : i1 to i32
    %c0_i32_26 = arith.constant 0 : i32
    %43 = arith.cmpi ne, %42, %c0_i32_26 : i32
    scf.if %43 {
      %c0_27 = arith.constant 0 : index
      %c0_28 = arith.constant 0 : index
      %44 = vector.load %arg7[%c0_27, %c0_28] : memref<16x1xf32, #tpu.memory_space<vmem>>, vector<16x1xf32>
      %c0_29 = arith.constant 0 : index
      %c0_30 = arith.constant 0 : index
      %45 = vector.load %arg8[%c0_29, %c0_30] : memref<16x1xf32, #tpu.memory_space<vmem>>, vector<16x1xf32>
      %46 = math.log %45 : vector<16x1xf32>
      %47 = arith.addf %44, %46 : vector<16x1xf32>
      %c0_31 = arith.constant 0 : index
      %c0_32 = arith.constant 0 : index
      %48 = vector.load %arg9[%c0_31, %c0_32] : memref<16x1xf32, #tpu.memory_space<vmem>>, vector<16x1xf32>
      %49 = arith.subf %47, %48 : vector<16x1xf32>
      %c0_33 = arith.constant 0 : index
      %c0_34 = arith.constant 0 : index
      %50 = vector.load %arg5[%c0_33, %c0_34] : memref<16x1xf32, #tpu.memory_space<vmem>>, vector<16x1xf32>
      %51 = arith.mulf %49, %50 : vector<16x1xf32>
      %c0_35 = arith.constant 0 : index
      %c0_36 = arith.constant 0 : index
      %52 = vector.load %arg6[%c0_35, %c0_36] : memref<16x1xf32, #tpu.memory_space<vmem>>, vector<16x1xf32>
      tpu.vector_store %arg6[%c0_35, %c0_36], %51 {strides = array<i32>} : memref<16x1xf32, #tpu.memory_space<vmem>>, vector<16x1xf32>,
    } else {
    }
    return
  }
  func.func @transform_0(%arg0: i32, %arg1: i32) -> (i32, i32) {
    %c0_i32 = arith.constant 0 : i32
    %c0_i32_0 = arith.constant 0 : i32
    return %arg0, %c0_i32 : i32, i32
  }
  func.func @transform_1(%arg0: i32, %arg1: i32) -> (i32, i32) {
    %c0_i32 = arith.constant 0 : i32
    %c0_i32_0 = arith.constant 0 : i32
    return %c0_i32, %arg1 : i32, i32
  }
  func.func @transform_2(%arg0: i32, %arg1: i32) -> (i32, i32) {
    %c0_i32 = arith.constant 0 : i32
    %c0_i32_0 = arith.constant 0 : i32
    return %arg0, %c0_i32 : i32, i32
  }
  func.func @transform_3(%arg0: i32, %arg1: i32) -> (i32, i32) {
    %c0_i32 = arith.constant 0 : i32
    %c0_i32_0 = arith.constant 0 : i32
    return %arg0, %c0_i32 : i32, i32
  }
  func.func @transform_4(%arg0: i32, %arg1: i32) -> (i32, i32) {
    %c0_i32 = arith.constant 0 : i32
    %c0_i32_0 = arith.constant 0 : i32
    return %arg0, %c0_i32 : i32, i32
  }
}

</mosaic_0001>

<llo_original>
// kernel: tpu_custom_call.1
$region0: #{tpu_custom_call.1}
  #allocation0 [shape = 'u32[]', space=smem, size = 0x4, offset = 0x4, fixed_abs, tag = 'smem constant byte address 0x4 - core index']
  #allocation1 [shape = 'u32[144,128]{1,0:T(1,128)}', space=vmem, size = 0x12000, scoped, tag = 'internal scratch']
  #allocation2 [shape = 'f32[16,1]{1,0:T(8,128)}', space=vmem, size = 0x2000, scoped, tag = 'scratch operand']
  #allocation3 [shape = 'f32[16,1]{1,0:T(8,128)}', space=vmem, size = 0x2000, scoped, tag = 'scratch operand']
  #allocation4 [shape = 'f32[16,1]{1,0:T(8,128)}', space=vmem, size = 0x2000, scoped, tag = 'scratch operand']
  %s0 = inlined_call_operand.vmem [shape: bf16[16,32], index: 0, kind: input, shape index: {}]
  %s1 = inlined_call_operand.vmem [shape: bf16[32,128], index: 1, kind: input, shape index: {}]
  %s2 = inlined_call_operand.vmem [shape: s32[16,1], index: 2, kind: input, shape index: {}]
  %s3 = inlined_call_operand.vmem [shape: f32[16,1], index: 3, kind: input, shape index: {}]
  %s4 = inlined_call_operand.vmem [shape: f32[16,1], index: 4, kind: output, shape index: {}]
  %s5 = sld [smem:[#allocation0]]
  $region34: #{tpu_custom_call.1} parent=0
    _
  %s7 = ssub.s32 1, %s5
  %s8 = scalar_select 0, %s7, %s5
  // Predicated region
  $region2: #{tpu_custom_call.1} parent=0 // pred_check
    _
  $region3: #{tpu_custom_call.1} parent=0 // pred_check_branch
    %10 = sbr.rel (0) target = $region5
  $region4: #{tpu_custom_call.1} parent=0 // pred_region
    _
  $region5: #{tpu_custom_call.1} parent=0 // pred_fallthru
    _
  // Predicated region
  $region6: #{tpu_custom_call.1} parent=0 // pred_check
    _
  $region7: #{tpu_custom_call.1} parent=0 // pred_check_branch
    %12 = sbr.rel (0) target = $region9
  $region8: #{tpu_custom_call.1} parent=0 // pred_region
    _
  $region9: #{tpu_custom_call.1} parent=0 // pred_fallthru
    _
  // Predicated region
  $region10: #{tpu_custom_call.1} parent=0 // pred_check
    _
  $region11: #{tpu_custom_call.1} parent=0 // pred_check_branch
    %14 = sbr.rel (0) target = $region13
  $region12: #{tpu_custom_call.1} parent=0 // pred_region
    _
  $region13: #{tpu_custom_call.1} parent=0 // pred_fallthru
    _
  // Predicated region
  $region14: #{tpu_custom_call.1} parent=0 // pred_check
    _
  $region15: #{tpu_custom_call.1} parent=0 // pred_check_branch
    %16 = sbr.rel (0) target = $region17
  $region16: #{tpu_custom_call.1} parent=0 // pred_region
    _
  $region17: #{tpu_custom_call.1} parent=0 // pred_fallthru
    _
  %p18 = scmp.eq.s32.totalorder 0, 0
  // Predicated region
  $region18: #{tpu_custom_call.1} parent=0 // pred_check
    %p19 = pneg %p18
  $region19: #{tpu_custom_call.1} parent=0 // pred_check_branch
    %21 = sbr.rel (%p19) target = $region21
  $region20: #{tpu_custom_call.1} parent=0 // pred_region
    %vm22 = vcmask 7168
    %23 = vst.msk [vmem:[#allocation2] sm:$0xff] %vm22, -inf
    %24 = vst.msk [vmem:[#allocation2 + $0x8] sm:$0xff] %vm22, -inf
    %25 = vst.msk [vmem:[#allocation3] sm:$0xff] %vm22, 0.0
    %26 = vst.msk [vmem:[#allocation3 + $0x8] sm:$0xff] %vm22, 0.0
    %27 = vst.msk [vmem:[#allocation4] sm:$0xff] %vm22, 0.0
    %28 = vst.msk [vmem:[#allocation4 + $0x8] sm:$0xff] %vm22, 0.0
  $region21: #{tpu_custom_call.1} parent=0 // pred_fallthru
    _
  %v29 = vld [vmem:[%s0] sm:$0xf]
  %v30 = vld [vmem:[%s0 + $0x4] sm:$0xf]
  %v31 = vld [vmem:[%s1] sm:$0xf]
  %v32 = vld [vmem:[%s1 + $0x4] sm:$0xf]
  %v33 = vld [vmem:[%s1 + $0x8] sm:$0xf]
  %v34 = vld [vmem:[%s1 + $0xc] sm:$0xf]
  %v37 = vunpack.c.l.b16 %v29
  %v38 = vunpack.c.l.b16 %v30
  %v39 = vpack.c.b16 %v38, %v37
  %v44 = vunpack.c.l.b16 %v31
  %v45 = vunpack.c.l.b16 %v32
  %v46 = vunpack.c.l.b16 %v33
  %v47 = vunpack.c.l.b16 %v34
  %v48 = vpack.c.b16 %v45, %v44
  %v49 = vpack.c.b16 %v47, %v46
  %vm52 = vcmask 261120
  %v54 = vsel %vm52, %v39, 0
  %56 = vmatprep.subr.bf16.mxu0 0
  %57 = vmatpush1.bf16.msra.mxu0 %v48
  %58 = vmatprep.subr.bf16.mxu0 0
  %59 = vmatpush1.bf16.msra.mxu0 %v49
  %60 = vmatprep.subr.bf16.mxu0 0
  %61 = vmatpush1.bf16.msra.mxu0 0
  %62 = vmatprep.subr.bf16.mxu0 0
  %63 = vmatpush1.bf16.msra.mxu0 0
  %64 = vmatprep.subr.bf16.mxu0 0
  %65 = vmatpush1.bf16.msra.mxu0 0
  %66 = vmatprep.subr.bf16.mxu0 0
  %67 = vmatpush1.bf16.msra.mxu0 0
  %68 = vmatprep.subr.bf16.mxu0 0
  %69 = vmatpush1.bf16.msra.mxu0 0
  %70 = vmatprep.subr.bf16.mxu0 0
  %71 = vmatpush1.bf16.msra.mxu0 0
  %72 = vmatprep.subr.bf16.mxu0 0
  %73 = vmatpush1.bf16.msra.mxu0 0
  %74 = vmatprep.subr.bf16.mxu0 0
  %75 = vmatpush1.bf16.msra.mxu0 0
  %76 = vmatprep.subr.bf16.mxu0 0
  %77 = vmatpush1.bf16.msra.mxu0 0
  %78 = vmatprep.subr.bf16.mxu0 0
  %79 = vmatpush1.bf16.msra.mxu0 0
  %80 = vmatprep.subr.bf16.mxu0 0
  %81 = vmatpush1.bf16.msra.mxu0 0
  %82 = vmatprep.subr.bf16.mxu0 0
  %83 = vmatpush1.bf16.msra.mxu0 0
  %84 = vmatprep.subr.bf16.mxu0 0
  %85 = vmatpush1.bf16.msra.mxu0 0
  %86 = vmatprep.subr.bf16.mxu0 0
  %87 = vmatpush1.bf16.msra.mxu0 0
  %88 = vmatprep.mubr.bf16.mxu0 0
  %89 = vmatmul.mubr.bf16.gmra.mrb[0].mxu0 %v54
  %v90 = vpop.f32.mrb[0].mxu0
  %v91 = vadd.f32 0.0, %v90
  %v92 = vpop.f32.mrb[0].mxu0
  %v93 = vpop.f32.mrb[0].mxu0
  %v94 = vadd.f32 0.0, %v93
  %v95 = vpop.f32.mrb[0].mxu0
  %96 = vdwg.mxu0
  %s97 = smul.u32 0, 128
  %v98 = vlaneseq
  %v99 = vand.u32 %v98, 127
  %v100 = vstv %s97
  %v101 = vadd.s32 %v100, %v99
  %vm102 = vcmp.lt.s32.totalorder %v101, 32
  %v103 = vsel %vm102, %v91, -inf
  %v104 = vsel %vm102, %v94, -inf
  %v105 = vld [vmem:[#allocation2] sm:$0xff]
  %v106 = vld [vmem:[#allocation2 + $0x8] sm:$0xff]
  %107 = vmax.xlane.f32.xlu0 %v103
  %v108 = vpop.xlane.xlu0 %107
  %109 = vmax.xlane.f32.xlu0 %v104
  %v110 = vpop.xlane.xlu0 %109
  %v111 = vmax.f32 %v105, %v108
  %v112 = vmax.f32 %v106, %v110
  %v113 = vsub.f32 %v105, %v111
  %v114 = vsub.f32 %v106, %v112
  %v115 = vmul.f32 %v113, 1.442695
  %v116 = vpow.pop %v115
  %v117 = vmul.f32 %v114, 1.442695
  %v118 = vpow.pop %v117
  %v119 = vld [vmem:[#allocation3] sm:$0xff]
  %v120 = vld [vmem:[#allocation3 + $0x8] sm:$0xff]
  %v121 = vmul.f32 %v116, %v119
  %v122 = vmul.f32 %v118, %v120
  %124 = vset.pattern.permute.xlu0 0
  %125 = vperm.xlu0 %124, %v111
  %v126 = vpop.permute.xlu0 %125
  %129 = vset.pattern.permute.xlu0 0
  %130 = vperm.xlu0 %129, %v112
  %v131 = vpop.permute.xlu0 %130
  %v133 = vsub.f32 %v103, %v126
  %v134 = vsub.f32 %v104, %v131
  %v135 = vmul.f32 %v133, 1.442695
  %v136 = vpow.pop %v135
  %v137 = vmul.f32 %v134, 1.442695
  %v138 = vpow.pop %v137
  %139 = vadd.xlane.f32.xlu0 %v136
  %v140 = vpop.xlane.xlu0 %139
  %141 = vadd.xlane.f32.xlu0 %v138
  %v142 = vpop.xlane.xlu0 %141
  %v143 = vadd.f32 %v121, %v140
  %v144 = vadd.f32 %v122, %v142
  %vm145 = vcmask 7168
  %146 = vst.msk [vmem:[#allocation3] sm:$0xff] %vm145, %v143
  %147 = vst.msk [vmem:[#allocation3 + $0x8] sm:$0xff] %vm145, %v144
  %148 = vst.msk [vmem:[#allocation2] sm:$0xff] %vm145, %v111
  %149 = vst.msk [vmem:[#allocation2 + $0x8] sm:$0xff] %vm145, %v112
  %v150 = vld [vmem:[#allocation4] sm:$0xff]
  %v151 = vld [vmem:[#allocation4 + $0x8] sm:$0xff]
  %v152 = vld [vmem:[%s2] sm:$0xff]
  %v153 = vld [vmem:[%s2 + $0x8] sm:$0xff]
  %154 = vset.pattern.permute.xlu0 0
  %155 = vperm.xlu0 %154, %v152
  %v156 = vpop.permute.xlu0 %155
  %157 = vset.pattern.permute.xlu0 0
  %158 = vperm.xlu0 %157, %v153
  %v159 = vpop.permute.xlu0 %158
  %vm160 = vcmp.eq.s32.totalorder %v101, %v156
  %vm161 = vcmp.eq.s32.totalorder %v101, %v159
  %v162 = vsel %vm160, %v103, 0.0
  %v163 = vsel %vm161, %v104, 0.0
  %164 = vadd.xlane.f32.xlu0 %v162
  %v165 = vpop.xlane.xlu0 %164
  %166 = vadd.xlane.f32.xlu0 %v163
  %v167 = vpop.xlane.xlu0 %166
  %v168 = vadd.f32 %v150, %v165
  %v169 = vadd.f32 %v151, %v167
  %170 = vst.msk [vmem:[#allocation4] sm:$0xff] %vm145, %v168
  %171 = vst.msk [vmem:[#allocation4 + $0x8] sm:$0xff] %vm145, %v169
  // Predicated region
  $region22: #{tpu_custom_call.1} parent=0 // pred_check
    %p172 = pneg %p18
  $region23: #{tpu_custom_call.1} parent=0 // pred_check_branch
    %174 = sbr.rel (%p172) target = $region25
  $region24: #{tpu_custom_call.1} parent=0 // pred_region
    %v175 = vld [vmem:[#allocation2] sm:$0xff]
    %v176 = vld [vmem:[#allocation2 + $0x8] sm:$0xff]
    %v177 = vld [vmem:[#allocation3] sm:$0xff]
    %v178 = vld [vmem:[#allocation3 + $0x8] sm:$0xff]
    %v179 = vlog2.pop %v177
    %v180 = vmul.f32 %v179, 0.6931472
    %v181 = vlog2.pop %v178
    %v182 = vmul.f32 %v181, 0.6931472
    %v183 = vadd.f32 %v175, %v180
    %v184 = vadd.f32 %v176, %v182
    %v185 = vld [vmem:[#allocation4] sm:$0xff]
    %v186 = vld [vmem:[#allocation4 + $0x8] sm:$0xff]
    %v187 = vsub.f32 %v183, %v185
    %v188 = vsub.f32 %v184, %v186
    %v189 = vld [vmem:[%s3] sm:$0xff]
    %v190 = vld [vmem:[%s3 + $0x8] sm:$0xff]
    %v191 = vmul.f32 %v187, %v189
    %v192 = vmul.f32 %v188, %v190
    %193 = vst.msk [vmem:[%s4] sm:$0xff] %vm145, %v191
    %194 = vst.msk [vmem:[%s4 + $0x8] sm:$0xff] %vm145, %v192
  $region25: #{tpu_custom_call.1} parent=0 // pred_fallthru
    _
  // Predicated region
  $region26: #{tpu_custom_call.1} parent=0 // pred_check
    _
  $region27: #{tpu_custom_call.1} parent=0 // pred_check_branch
    %196 = sbr.rel (0) target = $region29
  $region28: #{tpu_custom_call.1} parent=0 // pred_region
    _
  $region29: #{tpu_custom_call.1} parent=0 // pred_fallthru
    _
  // Predicated region
  $region30: #{tpu_custom_call.1} parent=0 // pred_check
    _
  $region31: #{tpu_custom_call.1} parent=0 // pred_check_branch
    %198 = sbr.rel (0) target = $region33
  $region32: #{tpu_custom_call.1} parent=0 // pred_region
    _
  $region33: #{tpu_custom_call.1} parent=0 // pred_fallthru
    _

</llo_original>
